<compile_context>
chip_gen: v7x
topology: tpu7x:2x2x1
jax: 0.10.0
libtpu: 0.0.40
codegen_flags: <defaults>
</compile_context>

<pallas_src>
import math
from functools import partial

import numpy as np
import jax
import jax.numpy as jnp
from jax.experimental import pallas as pl
from jax.experimental.pallas import tpu as pltpu

PAD_TOKEN = 0  # stand-in for config.pad_token

# Tile caps.  _TM_CAP raised 256 -> 512: weight traffic of the QKV projection
# is nm * (D*3D*w_bytes), so halving nm halves the dominant HBM stream on
# v5e/v6e.  TK stays a multiple of 128 (maps onto v5e's 128-wide MXU).
_TM_CAP = 512
_TK_CAP = 512
_TQ_CAP = 256   # query-row tile for the fused attention kernel


def _pick_tile(n, cap, gran):
    """Largest tile <= cap that divides n and is a multiple of gran (else full n)."""
    if n <= cap:
        return n
    t = (cap // gran) * gran
    while t >= gran:
        if n % t == 0:
            return t
        t -= gran
    # TODO(synk): pad awkward n instead of falling back to one full-size tile.
    return n


# ----------------------------------------------------------------------------
# Kernel 0: embedding scale + positional-embedding add (elementwise, tiled)
# ----------------------------------------------------------------------------
def _embed_scale_pos_kernel(x_ref, pe_ref, o_ref, *, scale):
    o_ref[...] = x_ref[...] * scale + pe_ref[...]


def embed_scale_pos(x, pe):
    """x: (B,S,D) embeddings; pe: (1,S,D). Returns x*sqrt(D) + pe."""
    B, S, D = x.shape
    ts = _pick_tile(S, 512, 8)
    return pl.pallas_call(
        partial(_embed_scale_pos_kernel, scale=math.sqrt(D)),
        out_shape=jax.ShapeDtypeStruct((B, S, D), x.dtype),
        grid=(B, S // ts),
        in_specs=[pl.BlockSpec((1, ts, D), lambda b, s: (b, s, 0)),
                  pl.BlockSpec((1, ts, D), lambda b, s: (0, s, 0))],
        out_specs=pl.BlockSpec((1, ts, D), lambda b, s: (b, s, 0)),
        compiler_params=pltpu.CompilerParams(
            dimension_semantics=("parallel", "parallel")),
    )(x, pe)


# ----------------------------------------------------------------------------
# Kernel 1: tiled matmul + bias (fused Q|K|V projection, one (D,3D) matmul)
# ----------------------------------------------------------------------------
def _matmul_bias_kernel(x_ref, w_ref, b_ref, o_ref, acc_ref, *, nk):
    @pl.when(pl.program_id(1) == 0)
    def _():
        acc_ref[...] = jnp.zeros_like(acc_ref)

    acc_ref[...] += jnp.dot(x_ref[...].astype(w_ref.dtype), w_ref[...],
                            preferred_element_type=jnp.float32)

    @pl.when(pl.program_id(1) == nk - 1)
    def _():
        o_ref[...] = (acc_ref[...] + b_ref[...]).astype(o_ref.dtype)


def pallas_matmul_bias(x2d, w, b):
    """x2d: (N, Din) f32; w: (Din, Dout) f32/bf16; b: (Dout,) f32."""
    N, Din = x2d.shape
    Dout = w.shape[1]
    tm = _pick_tile(N, _TM_CAP, 8)
    tk = _pick_tile(Din, _TK_CAP, 128)
    nm, nk = N // tm, Din // tk
    # TODO(synk): add a Dout tile axis (TN ~1024) for d_model >= 2048 on v7x.
    return pl.pallas_call(
        partial(_matmul_bias_kernel, nk=nk),
        out_shape=jax.ShapeDtypeStruct((N, Dout), x2d.dtype),
        grid=(nm, nk),
        in_specs=[pl.BlockSpec((tm, tk), lambda i, k: (i, k)),
                  pl.BlockSpec((tk, Dout), lambda i, k: (k, 0)),
                  pl.BlockSpec((1, Dout), lambda i, k: (0, 0))],
        out_specs=pl.BlockSpec((tm, Dout), lambda i, k: (i, 0)),
        scratch_shapes=[pltpu.VMEM((tm, Dout), jnp.float32)],
        compiler_params=pltpu.CompilerParams(
            dimension_semantics=("parallel", "arbitrary")),
    )(x2d, w, b.reshape(1, Dout))


# ----------------------------------------------------------------------------
# Kernel 2: fused relative-global-attention + fc + residual + LayerNorm1
#   one grid step = one (batch, query-row-tile); all heads inside the kernel
# ----------------------------------------------------------------------------
def _rga_block_kernel(q_ref, k_ref, v_ref, x_ref, e_ref, wfc_ref, bfc_ref,
                      g_ref, beta_ref, o_ref, attn_ref, *, h, dh, scale, eps,
                      nq):
    cd = wfc_ref.dtype                 # MXU operand dtype (f32 or bf16)
    TQ = q_ref.shape[1]
    S = k_ref.shape[1]
    q0 = pl.program_id(1) * TQ         # first global query row of this tile

    # qe keep-mask built in-kernel (global row i = q0 + r): keep iff i+m >= S-1.
    r_iota = jax.lax.broadcasted_iota(jnp.int32, (TQ, S), 0)
    m_iota = jax.lax.broadcasted_iota(jnp.int32, (TQ, S), 1)
    keep = (q0 + r_iota + m_iota) >= (S - 1)

    e = e_ref[...].astype(cd)          # (S, dh) shared by all heads

    # TODO(synk): convert to lax.fori_loop over heads once dynamic lane-dim ref
    # slices are exercised; static unroll + scratch keeps cross-head live state
    # down to the mask/iota only.
    for hd in range(h):
        c0, c1 = hd * dh, (hd + 1) * dh
        # 1/sqrt(dh) folded into q (exact: QE and QK^T are linear in q).
        q = (q_ref[0, :, c0:c1] * scale).astype(cd)      # (TQ, dh)
        k = k_ref[0, :, c0:c1].astype(cd)                # (S, dh)
        v = v_ref[0, :, c0:c1].astype(cd)                # (S, dh)

        # relative logits: QE = q @ E^T, qe-mask, then the "skew" as rolls:
        # row r needs a circular right-rotation by (q0 + r + 1); that is a
        # static strided roll (1 + r) composed with a uniform roll by q0.
        qe = jax.lax.dot_general(q, e, (((1,), (1,)), ((), ())),
                                 preferred_element_type=jnp.float32)   # (TQ,S)
        qe = jnp.where(keep, qe, 0.0)
        srel = pltpu.roll(qe, shift=1, axis=1, stride=1, stride_axis=0)
        if nq > 1:
            srel = pltpu.roll(srel, shift=q0, axis=1)

        qkt = jax.lax.dot_general(q, k, (((1,), (1,)), ((), ())),
                                  preferred_element_type=jnp.float32)  # (TQ,S)
        logits = qkt + srel
        mx = jnp.max(logits, axis=-1, keepdims=True)
        p = jnp.exp(logits - mx)
        denom = jnp.sum(p, axis=-1, keepdims=True)
        wgt = p * pl.reciprocal(denom, approx=True)      # softmax denom on EUP
        o_h = jnp.dot(wgt.astype(cd), v,
                      preferred_element_type=jnp.float32)              # (TQ,dh)
        attn_ref[:, c0:c1] = o_h.astype(attn_ref.dtype)  # concat into scratch

    # One K=D fc matmul over the concatenated heads (full MXU contraction).
    y = jnp.dot(attn_ref[...], wfc_ref[...],
                preferred_element_type=jnp.float32) + bfc_ref[...]
    # residual + LayerNorm1 (statistics in f32)
    z = y + x_ref[0]
    mu = jnp.mean(z, axis=-1, keepdims=True)
    zc = z - mu
    var = jnp.mean(zc * zc, axis=-1, keepdims=True)
    o_ref[0] = (zc * jax.lax.rsqrt(var + eps) * g_ref[...]
                + beta_ref[...]).astype(o_ref.dtype)


def fused_rga_ln(qkv, x, E, Wfc, bfc, g, beta, *, h, dh, tq, eps=1e-6):
    """qkv: (B,S,3D) f32; x: (B,S,D) f32 residual; E: (S,dh) f32; Wfc: (D,D)."""
    B, S, D = x.shape
    nq = S // tq
    return pl.pallas_call(
        partial(_rga_block_kernel, h=h, dh=dh, scale=1.0 / math.sqrt(dh),
                eps=eps, nq=nq),
        out_shape=jax.ShapeDtypeStruct((B, S, D), x.dtype),
        grid=(B, nq),
        in_specs=[
            # qkv passed three times: Q row tile, K and V column bands (full S).
            pl.BlockSpec((1, tq, D), lambda b, i: (b, i, 0)),   # Q rows
            pl.BlockSpec((1, S, D), lambda b, i: (b, 0, 1)),    # K (whole seq)
            pl.BlockSpec((1, S, D), lambda b, i: (b, 0, 2)),    # V (whole seq)
            pl.BlockSpec((1, tq, D), lambda b, i: (b, i, 0)),   # residual x
            pl.BlockSpec((S, dh), lambda b, i: (0, 0)),         # E
            pl.BlockSpec((D, D), lambda b, i: (0, 0)),          # Wfc
            pl.BlockSpec((1, D), lambda b, i: (0, 0)),          # bfc
            pl.BlockSpec((1, D), lambda b, i: (0, 0)),          # ln1 gamma
            pl.BlockSpec((1, D), lambda b, i: (0, 0)),          # ln1 beta
        ],
        out_specs=pl.BlockSpec((1, tq, D), lambda b, i: (b, i, 0)),
        scratch_shapes=[pltpu.VMEM((tq, D), Wfc.dtype)],        # head concat
        compiler_params=pltpu.CompilerParams(
            dimension_semantics=("parallel", "parallel")),
    )(qkv, qkv, qkv, x, E, Wfc, bfc.reshape(1, D), g.reshape(1, D),
      beta.reshape(1, D))


# ----------------------------------------------------------------------------
# Kernel 3: fused FFN_pre(+ReLU) -> FFN_suf -> residual -> LayerNorm2
# ----------------------------------------------------------------------------
def _ffn_ln_kernel(x_ref, w1_ref, b1_ref, w2_ref, b2_ref, g_ref, beta_ref,
                   o_ref, *, eps):
    cd = w1_ref.dtype
    x = x_ref[...]                                                    # (tm, D)
    t = jnp.dot(x.astype(cd), w1_ref[...],
                preferred_element_type=jnp.float32) + b1_ref[...]
    t = jnp.maximum(t, 0.0)                                           # ReLU
    y = jnp.dot(t.astype(cd), w2_ref[...],
                preferred_element_type=jnp.float32) + b2_ref[...]
    z = x + y                                                         # residual
    mu = jnp.mean(z, axis=-1, keepdims=True)
    zc = z - mu
    var = jnp.mean(zc * zc, axis=-1, keepdims=True)
    o_ref[...] = (zc * jax.lax.rsqrt(var + eps) * g_ref[...]
                  + beta_ref[...]).astype(o_ref.dtype)


def fused_ffn_ln(x2d, w1, b1, w2, b2, g, beta, eps=1e-6):
    N, D = x2d.shape
    Dh = w1.shape[1]
    tm = _pick_tile(N, _TM_CAP, 8)
    return pl.pallas_call(
        partial(_ffn_ln_kernel, eps=eps),
        out_shape=jax.ShapeDtypeStruct((N, D), x2d.dtype),
        grid=(N // tm,),
        in_specs=[pl.BlockSpec((tm, D), lambda i: (i, 0)),
                  pl.BlockSpec((D, Dh), lambda i: (0, 0)),
                  pl.BlockSpec((1, Dh), lambda i: (0, 0)),
                  pl.BlockSpec((Dh, D), lambda i: (0, 0)),
                  pl.BlockSpec((1, D), lambda i: (0, 0)),
                  pl.BlockSpec((1, D), lambda i: (0, 0)),
                  pl.BlockSpec((1, D), lambda i: (0, 0))],
        out_specs=pl.BlockSpec((tm, D), lambda i: (i, 0)),
        compiler_params=pltpu.CompilerParams(dimension_semantics=("parallel",)),
    )(x2d, w1, b1.reshape(1, Dh), w2, b2.reshape(1, D), g.reshape(1, D),
      beta.reshape(1, D))


# ----------------------------------------------------------------------------
# Self-test: validate the in-kernel (iota-mask + strided roll + dynamic roll)
# skew against the reference pad/reshape skew at the exact (S, TQ) used.
# Returns the TQ to use (requested TQ, or S as a static-roll-only fallback).
# ----------------------------------------------------------------------------
_SKEW_TQ_CACHE = {}


def _validated_tq(S, tq):
    key = (S, tq)
    if key in _SKEW_TQ_CACHE:
        return _SKEW_TQ_CACHE[key]

    qe = jax.random.normal(jax.random.PRNGKey(7), (S, S), jnp.float32)
    li = jnp.arange(S)[:, None]
    mi = jnp.arange(S)[None, :]
    qe_m = jnp.where(li + mi >= S - 1, qe, 0.0)
    want = jnp.pad(qe_m, ((0, 0), (1, 0))).reshape(S + 1, S)[1:, :]   # reference

    def try_tq(t):
        nq = S // t

        def k(x_ref, o_ref):
            q0 = pl.program_id(0) * t
            r = jax.lax.broadcasted_iota(jnp.int32, (t, S), 0)
            m = jax.lax.broadcasted_iota(jnp.int32, (t, S), 1)
            z = jnp.where(q0 + r + m >= S - 1, x_ref[...], 0.0)
            z = pltpu.roll(z, shift=1, axis=1, stride=1, stride_axis=0)
            if nq > 1:
                z = pltpu.roll(z, shift=q0, axis=1)
            o_ref[...] = z

        got = pl.pallas_call(
            k, out_shape=jax.ShapeDtypeStruct((S, S), jnp.float32),
            grid=(nq,),
            in_specs=[pl.BlockSpec((t, S), lambda i: (i, 0))],
            out_specs=pl.BlockSpec((t, S), lambda i: (i, 0)))(qe)
        return bool(jnp.allclose(got, want, atol=1e-5, rtol=1e-5))

    chosen = None
    for t in ([tq] if tq == S else [tq, S]):
        try:
            if try_tq(t):
                chosen = t
                break
        except Exception:
            continue
    if chosen is None:
        # TODO(synk): backend without pltpu.roll support -- no in-kernel skew path.
        raise NotImplementedError(
            "pltpu.roll-based relative-attention skew unavailable on this backend")
    _SKEW_TQ_CACHE[key] = chosen
    return chosen


# ----------------------------------------------------------------------------
# Model forward (glue orchestrating the Pallas kernels)
# ----------------------------------------------------------------------------
def encoder_layer_forward(x, p, h, tq, compute_dtype):
    B, S, D = x.shape
    dh = D // h
    N = B * S

    # Fused Q|K|V projection: one (D, 3D) matmul instead of three (D, D).
    qkv = pallas_matmul_bias(x.reshape(N, D), p["Wqkv"].astype(compute_dtype),
                             p["bqkv"]).reshape(B, S, 3 * D)

    # relative position embedding slice (len_q == len_k == S, S <= max_seq)
    E = p["E"][p["E"].shape[0] - S:, :]                               # (S, dh)

    # Fused: per-head QE + skew + softmax(QK^T + Srel) @ V + fc + residual + LN1.
    out1 = fused_rga_ln(qkv, x, E, p["Wfc"].astype(compute_dtype), p["bfc"],
                        p["ln1_g"], p["ln1_b"], h=h, dh=dh, tq=tq)
    # dropout1 / dropout2: identity (eval-mode forward)

    # Fused FFN_pre(+ReLU) -> FFN_suf -> residual -> LN2.
    out2 = fused_ffn_ln(out1.reshape(N, D),
                        p["W1"].astype(compute_dtype), p["b1"],
                        p["W2"].astype(compute_dtype), p["b2"],
                        p["ln2_g"], p["ln2_b"])
    return out2.reshape(B, S, D)


def encoder_music_forward(tokens, params, compute_dtype=jnp.float32,
                          tq_cap=_TQ_CAP):
    """tokens: (B, S) int32 -> (B, S, D) float32.

    compute_dtype: operand dtype fed to the MXU matmuls.  bfloat16 is valid on
    v5e as well as v6e/v7x (halves weight streaming, full-rate MXU);
    accumulation and softmax/LayerNorm statistics always stay in float32.
    """
    B, S = tokens.shape
    h = params["h"]

    emb = params["embedding"][tokens]                 # embedding gather (glue)
    pe = params["pos"][:, :S, :]
    x = embed_scale_pos(emb, pe)                      # x*sqrt(D) + pos
    # self.dropout: identity (eval mode)

    max_seq = params["layers"][0]["E"].shape[0]
    assert S <= max_seq, "seq_len > max_seq not supported"
    tq = _validated_tq(S, _pick_tile(S, tq_cap, 8))   # query-row tile

    for p in params["layers"]:
        x = encoder_layer_forward(x, p, h, tq, compute_dtype)
    return x
# TODO(synk): attention `mask` argument not exercised (forward called with mask=None).
# TODO(synk): len_k != len_q padding branch of _skewing (S > max_seq) not supported.


# ----------------------------------------------------------------------------
# Deterministic parameter construction
# ----------------------------------------------------------------------------
def sinusoid_pos_embedding(d, max_seq):
    pe = np.zeros((max_seq, d), dtype=np.float64)
    for pos in range(max_seq):
        for i in range(d):
            pe[pos, i] = math.sin(
                pos * math.exp(-math.log(10000) * i / d)
                * math.exp(math.log(10000) / d * (i % 2))
                + 0.5 * math.pi * (i % 2))
    return jnp.asarray(pe[None], dtype=jnp.float32)   # (1, max_seq, d)


def init_params(key, num_layers, d_model, vocab, max_len):
    h = d_model // 64
    dh = d_model // h
    keys = jax.random.split(key, 2 + num_layers)

    emb = 0.1 * jax.random.normal(keys[0], (vocab, d_model), jnp.float32)
    emb = emb.at[PAD_TOKEN].set(0.0)                  # padding_idx row zeroed

    layers = []
    for li in range(num_layers):
        lk = jax.random.split(keys[2 + li], 12)
        lin = lambda k, din, dout: 0.05 * jax.random.normal(k, (din, dout), jnp.float32)
        vec = lambda k, d: 0.01 * jax.random.normal(k, (d,), jnp.float32)
        p = dict(
            Wq=lin(lk[0], d_model, d_model), bq=vec(lk[1], d_model),
            Wk=lin(lk[2], d_model, d_model), bk=vec(lk[3], d_model),
            Wv=lin(lk[4], d_model, d_model), bv=vec(lk[5], d_model),
            Wfc=lin(lk[6], d_model, d_model), bfc=vec(lk[7], d_model),
            W1=lin(lk[8], d_model, d_model // 2), b1=vec(lk[9], d_model // 2),
            W2=lin(lk[10], d_model // 2, d_model), b2=vec(lk[11], d_model),
            ln1_g=jnp.ones((d_model,), jnp.float32), ln1_b=jnp.zeros((d_model,), jnp.float32),
            ln2_g=jnp.ones((d_model,), jnp.float32), ln2_b=jnp.zeros((d_model,), jnp.float32),
            E=jax.random.normal(jax.random.fold_in(keys[1], li), (max_len, dh), jnp.float32),
        )
        # Fused Q|K|V weight/bias for the single-matmul projection kernel.
        p["Wqkv"] = jnp.concatenate([p["Wq"], p["Wk"], p["Wv"]], axis=1)
        p["bqkv"] = jnp.concatenate([p["bq"], p["bk"], p["bv"]], axis=0)
        layers.append(p)

    return dict(embedding=emb, pos=sinusoid_pos_embedding(d_model, max_len),
                layers=layers, h=h, d_model=d_model)


# ----------------------------------------------------------------------------
# Pure-JAX reference (mirrors the PyTorch forward) for verification
# ----------------------------------------------------------------------------
def reference_forward(tokens, params):
    D = params["d_model"]; h = params["h"]; dh = D // h
    x = params["embedding"][tokens] * math.sqrt(D)
    x = x + params["pos"][:, : tokens.shape[1], :]
    for p in params["layers"]:
        B, S, _ = x.shape
        lin = lambda z, w, b: z @ w + b
        q = lin(x, p["Wq"], p["bq"]).reshape(B, S, h, dh).transpose(0, 2, 1, 3)
        k = lin(x, p["Wk"], p["bk"]).reshape(B, S, h, dh).transpose(0, 2, 1, 3)
        v = lin(x, p["Wv"], p["bv"]).reshape(B, S, h, dh).transpose(0, 2, 1, 3)
        E = p["E"][max(0, p["E"].shape[0] - S):]
        qe = jnp.einsum('bhld,md->bhlm', q, E)
        M = qe.shape[-1]
        li_ = jnp.arange(S)[:, None]; mi_ = jnp.arange(M)[None, :]
        qe = jnp.where((li_ + mi_) >= M - 1, qe, 0.0)
        padded = jnp.pad(qe, ((0, 0), (0, 0), (0, 0), (1, 0)))
        srel = padded.reshape(B, h, M + 1, S)[:, :, 1:, :]
        logits = (jnp.einsum('bhld,bhmd->bhlm', q, k) + srel) / math.sqrt(dh)
        w = jax.nn.softmax(logits, axis=-1)
        attn = jnp.einsum('bhlm,bhmd->bhld', w, v).transpose(0, 2, 1, 3).reshape(B, S, D)
        attn = lin(attn, p["Wfc"], p["bfc"])
        ln = lambda z, g, bb: (z - z.mean(-1, keepdims=True)) / jnp.sqrt(
            ((z - z.mean(-1, keepdims=True)) ** 2).mean(-1, keepdims=True) + 1e-6) * g + bb
        out1 = ln(attn + x, p["ln1_g"], p["ln1_b"])
        ffn = jax.nn.relu(lin(out1, p["W1"], p["b1"]))
        ffn = lin(ffn, p["W2"], p["b2"])
        x = ln(out1 + ffn, p["ln2_g"], p["ln2_b"])
    return x


# ----------------------------------------------------------------------------
if __name__ == "__main__":
    num_layers = 2
    d_model = 128            # -> h = d_model // 64 = 2 heads, dh = 64
    vocab = 64
    max_len = 16
    B, S = 2, 16

    key = jax.random.PRNGKey(0)
    params = init_params(key, num_layers, d_model, vocab, max_len)
    tokens = jax.random.randint(jax.random.fold_in(key, 123), (B, S), 0, vocab,
                                dtype=jnp.int32)

    ref = jax.block_until_ready(reference_forward(tokens, params))

    # f32 path (at S=16 the query tile is the whole sequence: static-roll skew).
    out = jax.block_until_ready(encoder_music_forward(tokens, params))
    assert out.shape == (B, S, d_model)
    assert bool(jnp.all(jnp.isfinite(out)))
    np.testing.assert_allclose(np.asarray(out), np.asarray(ref),
                               atol=2e-2, rtol=2e-2)

    # Query-row-tiled path (TQ=8, two tiles): exercises the dynamic-roll skew;
    # the self-test falls back to TQ=S automatically if it is unavailable.
    out_tiled = jax.block_until_ready(
        encoder_music_forward(tokens, params, tq_cap=8))
    np.testing.assert_allclose(np.asarray(out_tiled), np.asarray(ref),
                               atol=2e-2, rtol=2e-2)

    # bf16 MXU-operand path (v5e/v6e/v7x): f32 accumulation, looser tolerance.
    out_bf16 = jax.block_until_ready(
        encoder_music_forward(tokens, params, compute_dtype=jnp.bfloat16))
    assert bool(jnp.all(jnp.isfinite(out_bf16)))
    np.testing.assert_allclose(np.asarray(out_bf16), np.asarray(ref),
                               atol=1e-1, rtol=1e-1)

    print("KERNEL_OK")
</pallas_src>

<mosaic_0001>
module attributes {stable_mosaic.version = 11 : i64} {
  func.func @_embed_scale_pos_kernel(%arg0: i32, %arg1: i32, %arg2: memref<1x16x128xf32, #tpu.memory_space<vmem>>, %arg3: memref<1x16x128xf32, #tpu.memory_space<vmem>>, %arg4: memref<1x16x128xf32, #tpu.memory_space<vmem>>) attributes {dimension_semantics = [#tpu.dimension_semantics<parallel>, #tpu.dimension_semantics<parallel>], iteration_bounds = array<i64: 2, 1>, scalar_prefetch = 0 : i64, scratch_operands = 0 : i64, tpu.core_type = #tpu.core_type<tc>, window_params = [{transform_indices = @transform_0, window_bounds = array<i64: 1, 16, 128>}, {transform_indices = @transform_1, window_bounds = array<i64: 1, 16, 128>}, {transform_indices = @transform_2, window_bounds = array<i64: 1, 16, 128>}]} {
    %c0 = arith.constant 0 : index
    %c0_0 = arith.constant 0 : index
    %c0_1 = arith.constant 0 : index
    %0 = vector.load %arg2[%c0, %c0_0, %c0_1] : memref<1x16x128xf32, #tpu.memory_space<vmem>>, vector<1x16x128xf32>
    %cst = arith.constant 11.3137083 : f32
    %1 = vector.broadcast %cst : f32 to vector<1x16x128xf32>
    %2 = arith.mulf %0, %1 : vector<1x16x128xf32>
    %c0_2 = arith.constant 0 : index
    %c0_3 = arith.constant 0 : index
    %c0_4 = arith.constant 0 : index
    %3 = vector.load %arg3[%c0_2, %c0_3, %c0_4] : memref<1x16x128xf32, #tpu.memory_space<vmem>>, vector<1x16x128xf32>
    %4 = arith.addf %2, %3 : vector<1x16x128xf32>
    %c0_5 = arith.constant 0 : index
    %c0_6 = arith.constant 0 : index
    %c0_7 = arith.constant 0 : index
    %5 = vector.load %arg4[%c0_5, %c0_6, %c0_7] : memref<1x16x128xf32, #tpu.memory_space<vmem>>, vector<1x16x128xf32>
    tpu.vector_store %arg4[%c0_5, %c0_6, %c0_7], %4 {strides = array<i32>} : memref<1x16x128xf32, #tpu.memory_space<vmem>>, vector<1x16x128xf32>,
    return
  }
  func.func @transform_0(%arg0: i32, %arg1: i32) -> (i32, i32, i32) {
    %c0_i32 = arith.constant 0 : i32
    %c0_i32_0 = arith.constant 0 : i32
    return %arg0, %arg1, %c0_i32 : i32, i32, i32
  }
  func.func @transform_1(%arg0: i32, %arg1: i32) -> (i32, i32, i32) {
    %c0_i32 = arith.constant 0 : i32
    %c0_i32_0 = arith.constant 0 : i32
    %c0_i32_1 = arith.constant 0 : i32
    return %c0_i32, %arg1, %c0_i32_0 : i32, i32, i32
  }
  func.func @transform_2(%arg0: i32, %arg1: i32) -> (i32, i32, i32) {
    %c0_i32 = arith.constant 0 : i32
    %c0_i32_0 = arith.constant 0 : i32
    return %arg0, %arg1, %c0_i32 : i32, i32, i32
  }
}

</mosaic_0001>

<llo_original>
// kernel: tpu_custom_call.1
$region0: #{tpu_custom_call.1}
  #allocation0 [shape = 'u32[]', space=smem, size = 0x4, offset = 0x4, fixed_abs, tag = 'smem constant byte address 0x4 - core index']
  #allocation1 [shape = 'u32[144,128]{1,0:T(1,128)}', space=vmem, size = 0x12000, scoped, tag = 'internal scratch']
  %s0 = inlined_call_operand.hbm [shape: f32[2,16,128], index: 0, kind: input, shape index: {}]
  %s1 = inlined_call_operand.hbm [shape: f32[1,16,128], index: 1, kind: input, shape index: {}]
  %s2 = inlined_call_operand.hbm [shape: f32[2,16,128], index: 2, kind: output, shape index: {}]
  %s3 = sld [smem:[#allocation0]]
  $region49: #{tpu_custom_call.1} parent=0
    _
  %s5 = ssub.s32 1, %s3
  %s6 = scalar_select 0, %s5, %s3
  $region1: #{tpu_custom_call.1} parent=0
    #allocation2 [shape = 'u8[16384]{0}', space=vmem, size = 0x4000, scoped, tag = 'input window, operand 0']
    #allocation3 [shape = 's32[2]{0}', space=sflag, size = 0x8, scoped, tag = 'scoped memory for tpu_custom_call.1']
    #allocation4 [shape = 's32[2]{0}', space=sflag, size = 0x8, scoped, tag = 'scoped memory for tpu_custom_call.1']
    #allocation5 [shape = 'u8[8192]{0}', space=vmem, size = 0x2000, scoped, tag = 'input window, operand 1, single buffered']
    #allocation6 [shape = 's32[1]{0}', space=sflag, size = 0x4, scoped, tag = 'scoped memory for tpu_custom_call.1']
    #allocation7 [shape = 'u8[16384]{0}', space=vmem, size = 0x4000, scoped, tag = 'output window, operand 0']
    %7 = vsyncpa [#allocation3], 0
    %s8 = scalar_lea.sflag [#allocation3], 1
    %9 = vsyncpa %s8, 0
    %10 = vsyncpa [#allocation6], 0
    %11 = vsyncpa [#allocation4], 0
    %s12 = scalar_lea.sflag [#allocation4], 1
    %13 = vsyncpa %s12, 0
    loop: start=0, step=1, limit=4
    $region2: #{tpu_custom_call.1} parent=1 // loop_pre_header
      _
    $region3: #{tpu_custom_call.1} parent=1 // loop_header
      %s15 = sphi 0, %s19
      %p16 = scmp.ge.s32.totalorder %s15, 4
      %s22 = sphi 0, %s34
      %s23 = sphi 0, %s30
      %s24 = sphi 0, %s22
      %s25 = sphi 0, %s23
      %s26 = sphi 0, %s24
      %s27 = sphi 0, %s25
      %s39 = sphi 0, %s41
      %s42 = sphi 0, %s39
      %s43 = sphi 0, %s42
      %s59 = sphi 0, %s43
      %s65 = sphi 0, %s67
      %s68 = sphi 0, %s65
      %s69 = sphi 0, %s68
      %s85 = sphi 0, %s69
      %s93 = sphi 0, %s95
      %s96 = sphi 0, %s93
      %s97 = sphi 0, %s96
      %s113 = sphi 0, %s97
    $region4: #{tpu_custom_call.1} parent=1 // loop_header_branch
      %18 = sbr.rel (%p16) target = $region8
    $region5: #{tpu_custom_call.1} parent=1 // loop_body
      %s20 = ssub.s32 %s15, 1
      %s21 = ssub.s32 %s15, 2
      %s28 = sadd.s32 1, %s23
      %p29 = scmp.ge.s32.totalorder %s28, 1
      %s30 = scalar_select %p29, 0, %s28
      %s31 = sadd.s32 1, %s22
      %s32 = scalar_select %p29, %s31, %s22
      %p33 = scmp.ge.s32.totalorder %s32, 2
      %s34 = scalar_select %p33, 0, %s32
      %s35 = ssub.s32 %s22, %s34
      %s36 = ssub.s32 %s23, %s30
      %s37 = sor.u32 %s35, %s36
      %p38 = scmp.eq.s32.totalorder %s37, 0
      %s40 = sadd.s32 %s39, 1
      %s41 = scalar_select %p38, %s39, %s40
      %p44 = pneg %p38
      %p45 = scmp.eq.s32.totalorder %s15, 1
      %p46 = por %p44, %p45
      %p47 = scmp.ne.s32.totalorder %s39, %s42
      %p48 = scmp.eq.s32.totalorder %s15, 0
      %p49 = por %p47, %p48
      %p50 = scmp.ne.s32.totalorder %s39, %s42
      %p51 = scmp.eq.s32.totalorder %s20, 1
      %p52 = por %p50, %p51
      %p53 = scmp.ne.s32.totalorder %s42, %s43
      %p54 = scmp.eq.s32.totalorder %s20, 0
      %p55 = por %p53, %p54
      %p56 = scmp.ne.s32.totalorder %s42, %s43
      %p57 = scmp.eq.s32.totalorder %s21, 1
      %p58 = por %p56, %p57
      %p60 = scmp.ne.s32.totalorder %s43, %s59
      %p61 = scmp.eq.s32.totalorder %s21, 0
      %p62 = por %p60, %p61
      %s63 = ssub.s32 %s23, %s30
      %p64 = scmp.eq.s32.totalorder %s63, 0
      %s66 = sadd.s32 %s65, 1
      %s67 = scalar_select %p64, %s65, %s66
      %p70 = pneg %p64
      %p71 = scmp.eq.s32.totalorder %s15, 1
      %p72 = por %p70, %p71
      %p73 = scmp.ne.s32.totalorder %s65, %s68
      %p74 = scmp.eq.s32.totalorder %s15, 0
      %p75 = por %p73, %p74
      %p76 = scmp.ne.s32.totalorder %s65, %s68
      %p77 = scmp.eq.s32.totalorder %s20, 1
      %p78 = por %p76, %p77
      %p79 = scmp.ne.s32.totalorder %s68, %s69
      %p80 = scmp.eq.s32.totalorder %s20, 0
      %p81 = por %p79, %p80
      %p82 = scmp.ne.s32.totalorder %s68, %s69
      %p83 = scmp.eq.s32.totalorder %s21, 1
      %p84 = por %p82, %p83
      %p86 = scmp.ne.s32.totalorder %s69, %s85
      %p87 = scmp.eq.s32.totalorder %s21, 0
      %p88 = por %p86, %p87
      %s89 = ssub.s32 %s22, %s34
      %s90 = ssub.s32 %s23, %s30
      %s91 = sor.u32 %s89, %s90
      %p92 = scmp.eq.s32.totalorder %s91, 0
      %s94 = sadd.s32 %s93, 1
      %s95 = scalar_select %p92, %s93, %s94
      %p98 = pneg %p92
      %p99 = scmp.eq.s32.totalorder %s15, 1
      %p100 = por %p98, %p99
      %p101 = scmp.ne.s32.totalorder %s93, %s96
      %p102 = scmp.eq.s32.totalorder %s15, 0
      %p103 = por %p101, %p102
      %p104 = scmp.ne.s32.totalorder %s93, %s96
      %p105 = scmp.eq.s32.totalorder %s20, 1
      %p106 = por %p104, %p105
      %p107 = scmp.ne.s32.totalorder %s96, %s97
      %p108 = scmp.eq.s32.totalorder %s20, 0
      %p109 = por %p107, %p108
      %p110 = scmp.ne.s32.totalorder %s96, %s97
      %p111 = scmp.eq.s32.totalorder %s21, 1
      %p112 = por %p110, %p111
      %p114 = scmp.ne.s32.totalorder %s97, %s113
      %p115 = scmp.eq.s32.totalorder %s21, 0
      %p116 = por %p114, %p115
      %p117 = scmp.le.s32.totalorder 1, %s15
      %p118 = scmp.lt.s32.totalorder %s15, 3
      %p119 = pnand %p117, %p118
      %p120 = pneg %p119
      // Predicated region
      $region9: #{tpu_custom_call.1} parent=5 // pred_check
        _
      $region10: #{tpu_custom_call.1} parent=5 // pred_check_branch
        %122 = sbr.rel (%p119) target = $region12
      $region11: #{tpu_custom_call.1} parent=5 // pred_region
        %s123 = ssub.s32 %s15, 1
        // Predicated region
        $region13: #{tpu_custom_call.1} parent=11 // pred_check
          %p124 = pneg %p81
        $region14: #{tpu_custom_call.1} parent=11 // pred_check_branch
          %126 = sbr.rel (%p124) target = $region16
        $region15: #{tpu_custom_call.1} parent=11 // pred_region
          %s127 = smul.u32 2, %s25
          %s129 = ssub.s32 256, 256
          %130 = vsyncadd [#allocation6], %s129
          %s131 = smul.addr %s127, 128
          %s132 = scalar_lea.hbm %s1, %s131
          %s133 = sshll.u32 [#allocation5], 4
          %s134 = int_to_ptr.vmem [resolvable:$true] %s133
          %139 = dma.hbm_to_vmem [thread:$0]  %s132, 256, %s134, [#allocation6], 128, 128, 8
        $region16: #{tpu_custom_call.1} parent=11 // pred_fallthru
          _
      $region12: #{tpu_custom_call.1} parent=5 // pred_fallthru
        _
      %p140 = scmp.lt.s32.totalorder %s15, 2
      // Predicated region
      $region17: #{tpu_custom_call.1} parent=5 // pred_check
        %p141 = pneg %p140
      $region18: #{tpu_custom_call.1} parent=5 // pred_check_branch
        %143 = sbr.rel (%p141) target = $region20
      $region19: #{tpu_custom_call.1} parent=5 // pred_region
        // Predicated region
        $region21: #{tpu_custom_call.1} parent=19 // pred_check
          %p144 = pneg %p49
        $region22: #{tpu_custom_call.1} parent=19 // pred_check_branch
          %146 = sbr.rel (%p144) target = $region24
        $region23: #{tpu_custom_call.1} parent=19 // pred_region
          %s147 = sand.u32 %s39, 1
          %s148 = scalar_lea.sflag [#allocation3], %s147
          %s149 = sand.u32 %s39, 1
          %s150 = smul.addr %s149, 16
          %s151 = scalar_lea.vmem [#allocation2], %s150
          %s152 = smul.u32 2, %s23
          %s154 = ssub.s32 256, 256
          %155 = vsyncadd %s148, %s154
          %s156 = smul.addr %s22, 2
          %s157 = sadd.s32 %s152, %s156
          %s158 = smul.addr %s157, 128
          %s159 = scalar_lea.hbm %s0, %s158
          %s160 = sshll.u32 %s151, 4
          %s161 = int_to_ptr.vmem [resolvable:$true] %s160
          %166 = dma.hbm_to_vmem [thread:$0]  %s159, 256, %s161, %s148, 128, 128, 8
        $region24: #{tpu_custom_call.1} parent=19 // pred_fallthru
          _
      $region20: #{tpu_custom_call.1} parent=5 // pred_fallthru
        _
      %p167 = scmp.le.s32.totalorder 1, %s15
      %p168 = scmp.lt.s32.totalorder %s15, 3
      %p169 = pnand %p167, %p168
      %p170 = pneg %p169
      // Predicated region
      $region25: #{tpu_custom_call.1} parent=5 // pred_check
        _
      $region26: #{tpu_custom_call.1} parent=5 // pred_check_branch
        %172 = sbr.rel (%p169) target = $region28
      $region27: #{tpu_custom_call.1} parent=5 // pred_region
        %s173 = ssub.s32 %s15, 1
        %s174 = sand.u32 %s42, 1
        %s175 = scalar_lea.sflag [#allocation3], %s174
        %s176 = sand.u32 %s42, 1
        %s177 = smul.addr %s176, 16
        %s178 = scalar_lea.vmem [#allocation2], %s177
        // Predicated region
        $region29: #{tpu_custom_call.1} parent=27 // pred_check
          %p179 = pneg %p55
        $region30: #{tpu_custom_call.1} parent=27 // pred_check_branch
          %181 = sbr.rel (%p179) target = $region32
        $region31: #{tpu_custom_call.1} parent=27 // pred_region
          %182 = dma.done %s175, 256
        $region32: #{tpu_custom_call.1} parent=27 // pred_fallthru
          _
        // Predicated region
        $region33: #{tpu_custom_call.1} parent=27 // pred_check
          %p183 = pneg %p81
        $region34: #{tpu_custom_call.1} parent=27 // pred_check_branch
          %185 = sbr.rel (%p183) target = $region36
        $region35: #{tpu_custom_call.1} parent=27 // pred_region
          %186 = dma.done [#allocation6], 256
        $region36: #{tpu_custom_call.1} parent=27 // pred_fallthru
          _
        %s187 = sand.u32 %s42, 1
        %s188 = scalar_lea.sflag [#allocation3], %s187
        %s189 = sand.u32 %s42, 1
        %s190 = smul.addr %s189, 16
        %s191 = scalar_lea.vmem [#allocation2], %s190
        %p192 = pneg %p55
        %p193 = pneg %p52
        %p194 = pneg %p81
        %p195 = pneg %p78
        %p196 = pneg %p109
        %p197 = pneg %p106
        %s198 = sand.u32 %s96, 1
        %s199 = scalar_lea.sflag [#allocation4], %s198
        %s200 = sand.u32 %s96, 1
        %s201 = smul.addr %s200, 16
        %s202 = scalar_lea.vmem [#allocation7], %s201
        %s203 = smul.u32 2, %s25
        %s204 = smul.u32 2, %s25
        %s205 = smul.u32 2, %s25
        %v206 = vld [vmem:[%s178] sm:$0xff]
        %v207 = vld [vmem:[%s178 + $0x8] sm:$0xff]
        %v208 = vmul.f32 %v206, 11.313708
        %v209 = vmul.f32 %v207, 11.313708
        %v210 = vld [vmem:[#allocation5] sm:$0xff]
        %v211 = vld [vmem:[#allocation5 + $0x8] sm:$0xff]
        %v212 = vadd.f32 %v208, %v210
        %v213 = vadd.f32 %v209, %v211
        %214 = vst [vmem:[%s202] sm:$0xff] %v212
        %215 = vst [vmem:[%s202 + $0x8] sm:$0xff] %v213
        %s216 = sand.u32 %s96, 1
        %s217 = scalar_lea.sflag [#allocation4], %s216
        %s218 = sand.u32 %s96, 1
        %s219 = smul.addr %s218, 16
        %s220 = scalar_lea.vmem [#allocation7], %s219
        // Predicated region
        $region37: #{tpu_custom_call.1} parent=27 // pred_check
          %p221 = pneg %p106
        $region38: #{tpu_custom_call.1} parent=27 // pred_check_branch
          %223 = sbr.rel (%p221) target = $region40
        $region39: #{tpu_custom_call.1} parent=27 // pred_region
          %s224 = smul.u32 2, %s25
          %s226 = ssub.s32 256, 256
          %227 = vsyncadd %s217, %s226
          %s228 = smul.addr %s24, 2
          %s229 = sadd.s32 %s224, %s228
          %s230 = smul.addr %s229, 128
          %s231 = scalar_lea.hbm %s2, %s230
          %s232 = sshll.u32 %s220, 4
          %s233 = int_to_ptr.vmem [resolvable:$true] %s232
          %238 = dma.vmem_to_hbm [thread:$0]  %s233, 256, %s231, %s217, 128, 128, 8
        $region40: #{tpu_custom_call.1} parent=27 // pred_fallthru
          _
      $region28: #{tpu_custom_call.1} parent=5 // pred_fallthru
        _
      %p239 = scmp.le.s32.totalorder 2, %s15
      // Predicated region
      $region41: #{tpu_custom_call.1} parent=5 // pred_check
        %p240 = pneg %p239
      $region42: #{tpu_custom_call.1} parent=5 // pred_check_branch
        %242 = sbr.rel (%p240) target = $region44
      $region43: #{tpu_custom_call.1} parent=5 // pred_region
        %s243 = ssub.s32 %s15, 2
        // Predicated region
        $region45: #{tpu_custom_call.1} parent=43 // pred_check
          %p244 = pneg %p112
        $region46: #{tpu_custom_call.1} parent=43 // pred_check_branch
          %246 = sbr.rel (%p244) target = $region48
        $region47: #{tpu_custom_call.1} parent=43 // pred_region
          %s247 = sand.u32 %s97, 1
          %s248 = scalar_lea.sflag [#allocation4], %s247
          %s249 = sand.u32 %s97, 1
          %s250 = smul.addr %s249, 16
          %s251 = scalar_lea.vmem [#allocation7], %s250
          %252 = dma.done %s248, 256
        $region48: #{tpu_custom_call.1} parent=43 // pred_fallthru
          _
      $region44: #{tpu_custom_call.1} parent=5 // pred_fallthru
        _
    $region6: #{tpu_custom_call.1} parent=1 // loop_footer
      %s19 = sadd.s32 1, %s15
    $region7: #{tpu_custom_call.1} parent=1 // loop_footer_branch
      %14 = sbr.rel target = $region3
    $region8: #{tpu_custom_call.1} parent=1 // loop_exit
      _
    %253 = vsyncpa [#allocation3], 1
    %s254 = scalar_lea.sflag [#allocation3], 1
    %255 = vsyncpa %s254, 1
    %256 = vsyncpa [#allocation6], 1
    %257 = vsyncpa [#allocation4], 1
    %s258 = scalar_lea.sflag [#allocation4], 1
    %259 = vsyncpa %s258, 1

</llo_original>
